<compile_context>
chip_gen: v5e
topology: v5e:2x2
jax: 0.10.0
libtpu: 0.0.40
codegen_flags: <defaults>
</compile_context>

<pallas_src>
import functools

import jax
import jax.numpy as jnp
from jax import lax
from jax.experimental import pallas as pl
from jax.experimental.pallas import tpu as pltpu
from jax.scipy.special import logsumexp

LANE = 128


def _round_up(x, m):
    return (x + m - 1) // m * m


def _disc_rnn_kernel(xs_ref, h0_ref, wx_ref, wh_ref, b_ref,
                     hfin_ref, xproj_ref, *, hidden_size, seq_len):
    """All T timesteps of the RNN cell in a single invocation (no grid).

    xs_ref    : (T,  I)   f32   unpadded inputs, row t = x_t
    h0_ref    : (1,  H)   f32   unpadded initial hidden
    wx_ref    : (I,  HP)  w_dt  fused [W_i2h ; W_i2o].T rows for the x part
    wh_ref    : (HP, HP)  w_dt  fused [W_i2h ; W_i2o].T rows for the h part
                                (rows >= H are zero)
    b_ref     : (1,  HP)  f32   fused [b_i2h , b_i2o] (zero padded)
    hfin_ref  : (1,  HP)  f32   final fused row (hidden in cols 0..H-1)
    xproj_ref : (T,  HP)  f32   scratch: hoisted x-projection + bias
    """
    w_dt = wx_ref.dtype

    # Hoisted input projection + bias for all T steps: one M=T matmul.
    xproj_ref[...] = (
        jnp.dot(xs_ref[...].astype(w_dt), wx_ref[...],
                preferred_element_type=jnp.float32)
        + b_ref[...]
    )

    # Step 0: initial hidden is unpadded (1, H); rows >= H of wh are zero, so
    # contracting against only the first H rows is exact (no padding needed).
    h = xproj_ref[0:1, :] + jnp.dot(
        h0_ref[...].astype(w_dt), wh_ref[:hidden_size, :],
        preferred_element_type=jnp.float32)

    def step(t, h):
        # h: (1, HP) f32 fused carry: cols 0..H-1 = hidden, col H = presoftmax,
        # remaining cols = 0.  Padded cols multiply zero rows of wh -> inert.
        return xproj_ref[pl.ds(t, 1), :] + jnp.dot(
            h.astype(w_dt), wh_ref[...], preferred_element_type=jnp.float32)

    h = lax.fori_loop(1, seq_len, step, h,
                      unroll=True if seq_len <= 64 else 8)
    hfin_ref[...] = h


def pack_params(params, mxu_dtype=jnp.float32):
    """Pre-transpose + fuse + lane-pad the PyTorch-layout parameters (once).

    mxu_dtype=jnp.bfloat16 halves weight VMEM/DMA and uses the bf16-native MXU
    on v6e/v7x; bias stays f32 (VPU add / carry remain f32 everywhere).
    """
    w_i2h = jnp.asarray(params["w_i2h"], jnp.float32)   # (H, C)
    b_i2h = jnp.asarray(params["b_i2h"], jnp.float32)   # (H,)
    w_i2o = jnp.asarray(params["w_i2o"], jnp.float32)   # (1, C)
    b_i2o = jnp.asarray(params["b_i2o"], jnp.float32)   # (1,)
    hidden_size, c = w_i2h.shape
    input_size = c - hidden_size
    hp = _round_up(hidden_size + 1, LANE)

    # Fused, pre-transposed weight (C, H+1): cols 0..H-1 = i2h, col H = i2o.
    w_fused = jnp.concatenate([w_i2h, w_i2o], axis=0).T              # (C, H+1)
    b_fused = jnp.concatenate([b_i2h, b_i2o], axis=0)[None, :]       # (1, H+1)

    w_x = jnp.zeros((input_size, hp), jnp.float32)
    w_x = w_x.at[:, :hidden_size + 1].set(w_fused[:input_size])
    w_h = jnp.zeros((hp, hp), jnp.float32)
    w_h = w_h.at[:hidden_size, :hidden_size + 1].set(w_fused[input_size:])
    b = jnp.zeros((1, hp), jnp.float32).at[:, :hidden_size + 1].set(b_fused)
    return {"w_x": w_x.astype(mxu_dtype),
            "w_h": w_h.astype(mxu_dtype),
            "b": b}


def make_discriminator_scan(input_size, hidden_size):
    """Returns scan(xs, hidden0, packed) -> (outputs (T,1), hidden (H,)).

    Equivalent to calling discriminator.forward() once per row of xs (as in
    examine_forgery / train_rnn), in a single pallas_call invocation.
    """
    hp = _round_up(hidden_size + 1, LANE)

    @jax.jit
    def scan(xs, hidden0, packed):
        seq_len = xs.shape[0]
        xs32 = xs.astype(jnp.float32)                       # (T, I), unpadded
        h0 = hidden0.astype(jnp.float32)[None, :]           # (1, H), unpadded

        kernel = functools.partial(
            _disc_rnn_kernel, hidden_size=hidden_size, seq_len=seq_len)

        hfin = pl.pallas_call(
            kernel,
            out_shape=jax.ShapeDtypeStruct((1, hp), jnp.float32),
            scratch_shapes=[pltpu.VMEM((seq_len, hp), jnp.float32)],
        )(xs32, h0, packed["w_x"], packed["w_h"], packed["b"])

        # LogSoftmax over a length-1 axis is identically 0: no kernel work,
        # no HBM writeback for it.
        outputs = jnp.zeros((seq_len, 1), jnp.float32)
        hidden_final = hfin[0, :hidden_size]                 # (H,)
        return outputs, hidden_final

    return scan


def make_discriminator_forward(input_size, hidden_size):
    """Single-step forward matching discriminator.forward(input, hidden)."""
    scan = make_discriminator_scan(input_size, hidden_size)

    def forward(x, hidden, packed):
        outputs, hidden_new = scan(x[None, :], hidden, packed)
        return outputs[0], hidden_new                        # ((1,), (H,))

    return forward


def init_params(key, input_size, hidden_size):
    """nn.Linear-style init: uniform(-1/sqrt(fan_in), 1/sqrt(fan_in))."""
    c = input_size + hidden_size
    k1, k2, k3, k4 = jax.random.split(key, 4)
    bound = 1.0 / jnp.sqrt(jnp.float32(c))
    return {
        "w_i2h": jax.random.uniform(k1, (hidden_size, c), jnp.float32, -bound, bound),
        "b_i2h": jax.random.uniform(k2, (hidden_size,), jnp.float32, -bound, bound),
        "w_i2o": jax.random.uniform(k3, (1, c), jnp.float32, -bound, bound),
        "b_i2o": jax.random.uniform(k4, (1,), jnp.float32, -bound, bound),
    }


if __name__ == "__main__":
    input_size, hidden_size, seq_len = 16, 32, 8
    key = jax.random.PRNGKey(0)
    kp, kx = jax.random.split(key)

    params = init_params(kp, input_size, hidden_size)
    packed_f32 = pack_params(params)                              # exact path
    packed_bf16 = pack_params(params, mxu_dtype=jnp.bfloat16)     # v6e/v7x fast path

    xs = jax.random.normal(kx, (seq_len, input_size), jnp.float32)
    hidden0 = jnp.zeros((hidden_size,), jnp.float32)   # discriminator.initHidden()

    scan = make_discriminator_scan(input_size, hidden_size)
    forward = make_discriminator_forward(input_size, hidden_size)

    # Full sequence (== the examine_forgery loop) in one pallas_call.
    outputs, hidden_final = scan(xs, hidden0, packed_f32)
    jax.block_until_ready((outputs, hidden_final))

    # Single step (== discriminator.forward(input, hidden)).
    out1, h1 = forward(xs[0], hidden0, packed_f32)
    jax.block_until_ready((out1, h1))

    # bf16-weight fast path (same kernel, bf16 MXU operands, f32 accumulate).
    outputs_bf16, hidden_bf16 = scan(xs, hidden0, packed_bf16)
    jax.block_until_ready((outputs_bf16, hidden_bf16))

    # Pure-JAX reference of the same repeated forward pass.
    h_ref = hidden0
    ref_outs = []
    for t in range(seq_len):
        combined = jnp.concatenate([xs[t], h_ref], axis=0)
        h_ref = combined @ params["w_i2h"].T + params["b_i2h"]
        pre = combined @ params["w_i2o"].T + params["b_i2o"]
        ref_outs.append(pre - logsumexp(pre, axis=0))
    ref_outs = jnp.stack(ref_outs)                     # (T, 1)

    assert outputs.shape == (seq_len, 1)
    assert hidden_final.shape == (hidden_size,)
    assert jnp.allclose(outputs, ref_outs, atol=1e-5), "output mismatch"
    assert jnp.allclose(hidden_final, h_ref, atol=1e-3, rtol=1e-3), "hidden mismatch"

    combined1 = jnp.concatenate([xs[0], hidden0], axis=0)
    ref_h1 = combined1 @ params["w_i2h"].T + params["b_i2h"]
    assert out1.shape == (1,) and jnp.allclose(out1, 0.0), "single-step output mismatch"
    assert jnp.allclose(h1, ref_h1, atol=1e-3, rtol=1e-3), "single-step hidden mismatch"

    # bf16 path: correctness up to bf16 weight/operand quantization.
    assert outputs_bf16.shape == (seq_len, 1) and jnp.allclose(outputs_bf16, 0.0)
    assert jnp.all(jnp.isfinite(hidden_bf16))
    assert jnp.allclose(hidden_bf16, h_ref, atol=1e-1, rtol=1e-1), "bf16 hidden mismatch"

    print("KERNEL_OK")
</pallas_src>

<mosaic_0001>
module attributes {stable_mosaic.version = 11 : i64} {
  func.func @_disc_rnn_kernel(%arg0: memref<8x16xf32, #tpu.memory_space<vmem>>, %arg1: memref<1x32xf32, #tpu.memory_space<vmem>>, %arg2: memref<16x128xf32, #tpu.memory_space<vmem>>, %arg3: memref<128x128xf32, #tpu.memory_space<vmem>>, %arg4: memref<1x128xf32, #tpu.memory_space<vmem>>, %arg5: memref<1x128xf32, #tpu.memory_space<vmem>>, %arg6: memref<8x128xf32, #tpu.memory_space<vmem>>) attributes {dimension_semantics = [], scalar_prefetch = 0 : i64, scratch_operands = 1 : i64, tpu.core_type = #tpu.core_type<tc>} {
    %c0 = arith.constant 0 : index
    %c0_0 = arith.constant 0 : index
    %0 = vector.load %arg0[%c0, %c0_0] : memref<8x16xf32, #tpu.memory_space<vmem>>, vector<8x16xf32>
    %c0_1 = arith.constant 0 : index
    %c0_2 = arith.constant 0 : index
    %1 = vector.load %arg2[%c0_1, %c0_2] : memref<16x128xf32, #tpu.memory_space<vmem>>, vector<16x128xf32>
    %cst = arith.constant dense<0.000000e+00> : vector<8x128xf32>
    %2 = tpu.matmul %0, %1, %cst {dimension_numbers = #tpu.dot_dimension_numbers<[1], [0], [0], [1], [0, 0, 1, 1], [], []>} : vector<8x16xf32>, vector<16x128xf32>, vector<8x128xf32> -> vector<8x128xf32>
    %c0_3 = arith.constant 0 : index
    %c0_4 = arith.constant 0 : index
    %3 = vector.load %arg4[%c0_3, %c0_4] : memref<1x128xf32, #tpu.memory_space<vmem>>, vector<1x128xf32>
    %4 = vector.broadcast %3 : vector<1x128xf32> to vector<8x128xf32>
    %5 = arith.addf %2, %4 : vector<8x128xf32>
    %c0_5 = arith.constant 0 : index
    %c0_6 = arith.constant 0 : index
    %6 = vector.load %arg6[%c0_5, %c0_6] : memref<8x128xf32, #tpu.memory_space<vmem>>, vector<8x128xf32>
    tpu.vector_store %arg6[%c0_5, %c0_6], %5 {strides = array<i32>} : memref<8x128xf32, #tpu.memory_space<vmem>>, vector<8x128xf32>,
    %c0_7 = arith.constant 0 : index
    %c0_8 = arith.constant 0 : index
    %7 = vector.load %arg6[%c0_7, %c0_8] : memref<8x128xf32, #tpu.memory_space<vmem>>, vector<1x128xf32>
    %c0_9 = arith.constant 0 : index
    %c0_10 = arith.constant 0 : index
    %8 = vector.load %arg1[%c0_9, %c0_10] : memref<1x32xf32, #tpu.memory_space<vmem>>, vector<1x32xf32>
    %c0_11 = arith.constant 0 : index
    %c0_12 = arith.constant 0 : index
    %9 = vector.load %arg3[%c0_11, %c0_12] : memref<128x128xf32, #tpu.memory_space<vmem>>, vector<32x128xf32>
    %cst_13 = arith.constant dense<0.000000e+00> : vector<1x128xf32>
    %10 = tpu.matmul %8, %9, %cst_13 {dimension_numbers = #tpu.dot_dimension_numbers<[1], [0], [0], [1], [0, 0, 1, 1], [], []>} : vector<1x32xf32>, vector<32x128xf32>, vector<1x128xf32> -> vector<1x128xf32>
    %11 = arith.addf %7, %10 : vector<1x128xf32>
    %c1_i32 = arith.constant 1 : i32
    %12 = arith.index_cast %c1_i32 : i32 to index
    %c0_14 = arith.constant 0 : index
    %13 = vector.load %arg6[%12, %c0_14] : memref<8x128xf32, #tpu.memory_space<vmem>>, vector<1x128xf32>
    %c0_15 = arith.constant 0 : index
    %c0_16 = arith.constant 0 : index
    %14 = vector.load %arg3[%c0_15, %c0_16] : memref<128x128xf32, #tpu.memory_space<vmem>>, vector<128x128xf32>
    %cst_17 = arith.constant dense<0.000000e+00> : vector<1x128xf32>
    %15 = tpu.matmul %11, %14, %cst_17 {dimension_numbers = #tpu.dot_dimension_numbers<[1], [0], [0], [1], [0, 0, 1, 1], [], []>} : vector<1x128xf32>, vector<128x128xf32>, vector<1x128xf32> -> vector<1x128xf32>
    %16 = arith.addf %13, %15 : vector<1x128xf32>
    %c2_i32 = arith.constant 2 : i32
    %17 = arith.index_cast %c2_i32 : i32 to index
    %c0_18 = arith.constant 0 : index
    %18 = vector.load %arg6[%17, %c0_18] : memref<8x128xf32, #tpu.memory_space<vmem>>, vector<1x128xf32>
    %c0_19 = arith.constant 0 : index
    %c0_20 = arith.constant 0 : index
    %19 = vector.load %arg3[%c0_19, %c0_20] : memref<128x128xf32, #tpu.memory_space<vmem>>, vector<128x128xf32>
    %cst_21 = arith.constant dense<0.000000e+00> : vector<1x128xf32>
    %20 = tpu.matmul %16, %19, %cst_21 {dimension_numbers = #tpu.dot_dimension_numbers<[1], [0], [0], [1], [0, 0, 1, 1], [], []>} : vector<1x128xf32>, vector<128x128xf32>, vector<1x128xf32> -> vector<1x128xf32>
    %21 = arith.addf %18, %20 : vector<1x128xf32>
    %c3_i32 = arith.constant 3 : i32
    %22 = arith.index_cast %c3_i32 : i32 to index
    %c0_22 = arith.constant 0 : index
    %23 = vector.load %arg6[%22, %c0_22] : memref<8x128xf32, #tpu.memory_space<vmem>>, vector<1x128xf32>
    %c0_23 = arith.constant 0 : index
    %c0_24 = arith.constant 0 : index
    %24 = vector.load %arg3[%c0_23, %c0_24] : memref<128x128xf32, #tpu.memory_space<vmem>>, vector<128x128xf32>
    %cst_25 = arith.constant dense<0.000000e+00> : vector<1x128xf32>
    %25 = tpu.matmul %21, %24, %cst_25 {dimension_numbers = #tpu.dot_dimension_numbers<[1], [0], [0], [1], [0, 0, 1, 1], [], []>} : vector<1x128xf32>, vector<128x128xf32>, vector<1x128xf32> -> vector<1x128xf32>
    %26 = arith.addf %23, %25 : vector<1x128xf32>
    %c4_i32 = arith.constant 4 : i32
    %27 = arith.index_cast %c4_i32 : i32 to index
    %c0_26 = arith.constant 0 : index
    %28 = vector.load %arg6[%27, %c0_26] : memref<8x128xf32, #tpu.memory_space<vmem>>, vector<1x128xf32>
    %c0_27 = arith.constant 0 : index
    %c0_28 = arith.constant 0 : index
    %29 = vector.load %arg3[%c0_27, %c0_28] : memref<128x128xf32, #tpu.memory_space<vmem>>, vector<128x128xf32>
    %cst_29 = arith.constant dense<0.000000e+00> : vector<1x128xf32>
    %30 = tpu.matmul %26, %29, %cst_29 {dimension_numbers = #tpu.dot_dimension_numbers<[1], [0], [0], [1], [0, 0, 1, 1], [], []>} : vector<1x128xf32>, vector<128x128xf32>, vector<1x128xf32> -> vector<1x128xf32>
    %31 = arith.addf %28, %30 : vector<1x128xf32>
    %c5_i32 = arith.constant 5 : i32
    %32 = arith.index_cast %c5_i32 : i32 to index
    %c0_30 = arith.constant 0 : index
    %33 = vector.load %arg6[%32, %c0_30] : memref<8x128xf32, #tpu.memory_space<vmem>>, vector<1x128xf32>
    %c0_31 = arith.constant 0 : index
    %c0_32 = arith.constant 0 : index
    %34 = vector.load %arg3[%c0_31, %c0_32] : memref<128x128xf32, #tpu.memory_space<vmem>>, vector<128x128xf32>
    %cst_33 = arith.constant dense<0.000000e+00> : vector<1x128xf32>
    %35 = tpu.matmul %31, %34, %cst_33 {dimension_numbers = #tpu.dot_dimension_numbers<[1], [0], [0], [1], [0, 0, 1, 1], [], []>} : vector<1x128xf32>, vector<128x128xf32>, vector<1x128xf32> -> vector<1x128xf32>
    %36 = arith.addf %33, %35 : vector<1x128xf32>
    %c6_i32 = arith.constant 6 : i32
    %37 = arith.index_cast %c6_i32 : i32 to index
    %c0_34 = arith.constant 0 : index
    %38 = vector.load %arg6[%37, %c0_34] : memref<8x128xf32, #tpu.memory_space<vmem>>, vector<1x128xf32>
    %c0_35 = arith.constant 0 : index
    %c0_36 = arith.constant 0 : index
    %39 = vector.load %arg3[%c0_35, %c0_36] : memref<128x128xf32, #tpu.memory_space<vmem>>, vector<128x128xf32>
    %cst_37 = arith.constant dense<0.000000e+00> : vector<1x128xf32>
    %40 = tpu.matmul %36, %39, %cst_37 {dimension_numbers = #tpu.dot_dimension_numbers<[1], [0], [0], [1], [0, 0, 1, 1], [], []>} : vector<1x128xf32>, vector<128x128xf32>, vector<1x128xf32> -> vector<1x128xf32>
    %41 = arith.addf %38, %40 : vector<1x128xf32>
    %c7_i32 = arith.constant 7 : i32
    %42 = arith.index_cast %c7_i32 : i32 to index
    %c0_38 = arith.constant 0 : index
    %43 = vector.load %arg6[%42, %c0_38] : memref<8x128xf32, #tpu.memory_space<vmem>>, vector<1x128xf32>
    %c0_39 = arith.constant 0 : index
    %c0_40 = arith.constant 0 : index
    %44 = vector.load %arg3[%c0_39, %c0_40] : memref<128x128xf32, #tpu.memory_space<vmem>>, vector<128x128xf32>
    %cst_41 = arith.constant dense<0.000000e+00> : vector<1x128xf32>
    %45 = tpu.matmul %41, %44, %cst_41 {dimension_numbers = #tpu.dot_dimension_numbers<[1], [0], [0], [1], [0, 0, 1, 1], [], []>} : vector<1x128xf32>, vector<128x128xf32>, vector<1x128xf32> -> vector<1x128xf32>
    %46 = arith.addf %43, %45 : vector<1x128xf32>
    %c7_i32_42 = arith.constant 7 : i32
    %c0_43 = arith.constant 0 : index
    %c0_44 = arith.constant 0 : index
    %47 = vector.load %arg5[%c0_43, %c0_44] : memref<1x128xf32, #tpu.memory_space<vmem>>, vector<1x128xf32>
    tpu.vector_store %arg5[%c0_43, %c0_44], %46 {strides = array<i32>} : memref<1x128xf32, #tpu.memory_space<vmem>>, vector<1x128xf32>,
    return
  }
}

</mosaic_0001>

<llo_original>
// kernel: scan.1
$region0: #{scan.1}
  #allocation0 [shape = 'u32[]', space=smem, size = 0x4, offset = 0x4, fixed_abs, tag = 'smem constant byte address 0x4 - core index']
  #allocation1 [shape = 'u32[72,128]{1,0:T(1,128)}', space=vmem, size = 0x9000, scoped, tag = 'internal scratch']
  #allocation2 [shape = 'f32[8,128]{1,0:T(8,128)}', space=vmem, size = 0x1000, scoped, tag = 'scratch operand']
  %s0 = inlined_call_operand.hbm [shape: f32[8,16], index: 0, kind: input, shape index: {}]
  %s1 = inlined_call_operand.vmem [shape: f32[1,32], index: 1, kind: input, shape index: {}]
  %s2 = inlined_call_operand.hbm [shape: f32[16,128], index: 2, kind: input, shape index: {}]
  %s3 = inlined_call_operand.hbm [shape: f32[128,128], index: 3, kind: input, shape index: {}]
  %s4 = inlined_call_operand.vmem [shape: f32[1,128], index: 4, kind: input, shape index: {}]
  %s5 = inlined_call_operand.vmem [shape: f32[1,128], index: 5, kind: output, shape index: {}]
  %s6 = sld [smem:[#allocation0]]
  $region42: #{scan.1} parent=0
    _
  %s8 = ssub.s32 1, %s6
  %s9 = scalar_select 0, %s8, %s6
  $region1: #{scan.1} parent=0
    #allocation3 [shape = 'u8[4096]{0}', space=vmem, size = 0x1000, scoped, tag = 'input window, operand 0, single buffered']
    #allocation4 [shape = 's32[1]{0}', space=sflag, size = 0x4, scoped, tag = 'scoped memory for scan.1']
    #allocation5 [shape = 'u8[8192]{0}', space=vmem, size = 0x2000, scoped, tag = 'input window, operand 2, single buffered']
    #allocation6 [shape = 's32[1]{0}', space=sflag, size = 0x4, scoped, tag = 'scoped memory for scan.1']
    #allocation7 [shape = 'u8[65536]{0}', space=vmem, size = 0x10000, scoped, tag = 'input window, operand 3, single buffered']
    %10 = vsyncpa [#allocation4], 0
    %11 = vsyncpa [#allocation6], 0
    // Predicated region
    $region2: #{scan.1} parent=1 // pred_check
      _
    $region3: #{scan.1} parent=1 // pred_check_branch
      %13 = sbr.rel (0) target = $region5
    $region4: #{scan.1} parent=1 // pred_region
      %15 = vsyncadd [#allocation4], 0
      %s17 = sshll.u32 %s0, 4
      %s18 = int_to_ptr.hbm [resolvable:$true] %s17
      %s19 = sshll.u32 [#allocation3], 4
      %s20 = int_to_ptr.vmem [resolvable:$true] %s19
      %22 = dma.hbm_to_vmem [thread:$0]  %s18, 128, %s20, [#allocation4]
    $region5: #{scan.1} parent=1 // pred_fallthru
      _
    // Predicated region
    $region6: #{scan.1} parent=1 // pred_check
      _
    $region7: #{scan.1} parent=1 // pred_check_branch
      %24 = sbr.rel (0) target = $region9
    $region8: #{scan.1} parent=1 // pred_region
      _
    $region9: #{scan.1} parent=1 // pred_fallthru
      _
    // Predicated region
    $region10: #{scan.1} parent=1 // pred_check
      _
    $region11: #{scan.1} parent=1 // pred_check_branch
      %26 = sbr.rel (0) target = $region13
    $region12: #{scan.1} parent=1 // pred_region
      %28 = vsyncadd [#allocation6], 0
      %s29 = sshll.u32 %s2, 4
      %s30 = int_to_ptr.hbm [resolvable:$true] %s29
      %s31 = sshll.u32 [#allocation5], 4
      %s32 = int_to_ptr.vmem [resolvable:$true] %s31
      %37 = dma.hbm_to_vmem [thread:$0]  %s30, 256, %s32, [#allocation6], 128, 128, 8
    $region13: #{scan.1} parent=1 // pred_fallthru
      _
    // Predicated region
    $region14: #{scan.1} parent=1 // pred_check
      _
    $region15: #{scan.1} parent=1 // pred_check_branch
      %39 = sbr.rel (0) target = $region17
    $region16: #{scan.1} parent=1 // pred_region
      %41 = vsyncadd [#allocation6], 0
      %s42 = sshll.u32 %s3, 4
      %s43 = int_to_ptr.hbm [resolvable:$true] %s42
      %s44 = sshll.u32 [#allocation7], 4
      %s45 = int_to_ptr.vmem [resolvable:$true] %s44
      %50 = dma.hbm_to_vmem [thread:$0]  %s43, 2048, %s45, [#allocation6], 128, 128, 8
    $region17: #{scan.1} parent=1 // pred_fallthru
      _
    // Predicated region
    $region18: #{scan.1} parent=1 // pred_check
      _
    $region19: #{scan.1} parent=1 // pred_check_branch
      %52 = sbr.rel (0) target = $region21
    $region20: #{scan.1} parent=1 // pred_region
      _
    $region21: #{scan.1} parent=1 // pred_fallthru
      _
    // Predicated region
    $region22: #{scan.1} parent=1 // pred_check
      _
    $region23: #{scan.1} parent=1 // pred_check_branch
      %54 = sbr.rel (0) target = $region25
    $region24: #{scan.1} parent=1 // pred_region
      %56 = dma.done [#allocation4], 128
    $region25: #{scan.1} parent=1 // pred_fallthru
      _
    // Predicated region
    $region26: #{scan.1} parent=1 // pred_check
      _
    $region27: #{scan.1} parent=1 // pred_check_branch
      %58 = sbr.rel (0) target = $region29
    $region28: #{scan.1} parent=1 // pred_region
      %60 = dma.done [#allocation6], 256
    $region29: #{scan.1} parent=1 // pred_fallthru
      _
    // Predicated region
    $region30: #{scan.1} parent=1 // pred_check
      _
    $region31: #{scan.1} parent=1 // pred_check_branch
      %62 = sbr.rel (0) target = $region33
    $region32: #{scan.1} parent=1 // pred_region
      %64 = dma.done [#allocation6], 2048
    $region33: #{scan.1} parent=1 // pred_fallthru
      _
    %v65 = vld [vmem:[#allocation3] sm:$0xff]
    %v66 = vld [vmem:[#allocation5] sm:$0xff]
    %v67 = vld [vmem:[#allocation5 + $0x8] sm:$0xff]
    %v68 = vld [vmem:[%s4] sm:$0x1]
    %v70 = vperm.slane %v68, 0
    %vm72 = vcmask 130048
    %v74 = vsel %vm72, %v65, 0
    %76 = vmatpush.msra.mxu0 0.0
    %77 = vmatpush.msra.mxu0 0.0
    %78 = vmatpush.msra.mxu0 0.0
    %79 = vmatpush.msra.mxu0 0.0
    %80 = vmatpush.msra.mxu0 0.0
    %81 = vmatpush.msra.mxu0 0.0
    %82 = vmatpush.msra.mxu0 0.0
    %83 = vmatpush.msra.mxu0 0.0
    %84 = vmatpush.msra.mxu0 0.0
    %85 = vmatpush.msra.mxu0 0.0
    %86 = vmatpush.msra.mxu0 0.0
    %87 = vmatpush.msra.mxu0 0.0
    %88 = vmatpush.msra.mxu0 0.0
    %89 = vmatpush.msra.mxu0 0.0
    %90 = vmatpush.msra.mxu0 %v67
    %91 = vmatpush.msra.mxu0 %v66
    %92 = vmatmul.f32.gmra.mxu0 %v74
    %v93 = vpop.f32.mrf.mxu0
    %v94 = vadd.f32 %v70, %v93
    %95 = vdwg.mxu0
    %96 = vst [vmem:[#allocation2] sm:$0xff] %v94
    %v97 = vld [vmem:[#allocation2] sm:$0x1]
    %v98 = vld [vmem:[%s1] sm:$0x1]
    %v99 = vld [vmem:[#allocation7] sm:$0xff]
    %v100 = vld [vmem:[#allocation7 + $0x8] sm:$0xff]
    %v101 = vld [vmem:[#allocation7 + $0x10] sm:$0xff]
    %v102 = vld [vmem:[#allocation7 + $0x18] sm:$0xff]
    %vm103 = vcmask 261120
    %v105 = vsel %vm103, %v98, 0
    %107 = vmatpush.msra.mxu0 0.0
    %108 = vmatpush.msra.mxu0 0.0
    %109 = vmatpush.msra.mxu0 0.0
    %110 = vmatpush.msra.mxu0 0.0
    %111 = vmatpush.msra.mxu0 0.0
    %112 = vmatpush.msra.mxu0 0.0
    %113 = vmatpush.msra.mxu0 0.0
    %114 = vmatpush.msra.mxu0 0.0
    %115 = vmatpush.msra.mxu0 0.0
    %116 = vmatpush.msra.mxu0 0.0
    %117 = vmatpush.msra.mxu0 0.0
    %118 = vmatpush.msra.mxu0 0.0
    %119 = vmatpush.msra.mxu0 %v102
    %120 = vmatpush.msra.mxu0 %v101
    %121 = vmatpush.msra.mxu0 %v100
    %122 = vmatpush.msra.mxu0 %v99
    %123 = vmatmul.f32.gmra.mxu0 %v105
    %v124 = vpop.f32.mrf.mxu0
    %v125 = vadd.f32 0.0, %v124
    %126 = vdwg.mxu0
    %v127 = vadd.f32 %v97, %v125
    %v128 = vld [vmem:[#allocation2 + $0x1] sm:$0x1]
    %v129 = vld [vmem:[#allocation7] sm:$0xff]
    %v130 = vld [vmem:[#allocation7 + $0x8] sm:$0xff]
    %v131 = vld [vmem:[#allocation7 + $0x10] sm:$0xff]
    %v132 = vld [vmem:[#allocation7 + $0x18] sm:$0xff]
    %v133 = vld [vmem:[#allocation7 + $0x20] sm:$0xff]
    %v134 = vld [vmem:[#allocation7 + $0x28] sm:$0xff]
    %v135 = vld [vmem:[#allocation7 + $0x30] sm:$0xff]
    %v136 = vld [vmem:[#allocation7 + $0x38] sm:$0xff]
    %v137 = vld [vmem:[#allocation7 + $0x40] sm:$0xff]
    %v138 = vld [vmem:[#allocation7 + $0x48] sm:$0xff]
    %v139 = vld [vmem:[#allocation7 + $0x50] sm:$0xff]
    %v140 = vld [vmem:[#allocation7 + $0x58] sm:$0xff]
    %v141 = vld [vmem:[#allocation7 + $0x60] sm:$0xff]
    %v142 = vld [vmem:[#allocation7 + $0x68] sm:$0xff]
    %v143 = vld [vmem:[#allocation7 + $0x70] sm:$0xff]
    %v144 = vld [vmem:[#allocation7 + $0x78] sm:$0xff]
    %145 = vmatpush.msra.mxu0 %v144
    %146 = vmatpush.msra.mxu0 %v143
    %147 = vmatpush.msra.mxu0 %v142
    %148 = vmatpush.msra.mxu0 %v141
    %149 = vmatpush.msra.mxu0 %v140
    %150 = vmatpush.msra.mxu0 %v139
    %151 = vmatpush.msra.mxu0 %v138
    %152 = vmatpush.msra.mxu0 %v137
    %153 = vmatpush.msra.mxu0 %v136
    %154 = vmatpush.msra.mxu0 %v135
    %155 = vmatpush.msra.mxu0 %v134
    %156 = vmatpush.msra.mxu0 %v133
    %157 = vmatpush.msra.mxu0 %v132
    %158 = vmatpush.msra.mxu0 %v131
    %159 = vmatpush.msra.mxu0 %v130
    %160 = vmatpush.msra.mxu0 %v129
    %161 = vmatmul.f32.gmra.mxu0 %v127
    %v162 = vpop.f32.mrf.mxu0
    %v163 = vadd.f32 0.0, %v162
    %164 = vdwg.mxu0
    %v165 = vadd.f32 %v128, %v163
    %v166 = vld [vmem:[#allocation2 + $0x2] sm:$0x1]
    %167 = vmatpush.msra.mxu0 %v144
    %168 = vmatpush.msra.mxu0 %v143
    %169 = vmatpush.msra.mxu0 %v142
    %170 = vmatpush.msra.mxu0 %v141
    %171 = vmatpush.msra.mxu0 %v140
    %172 = vmatpush.msra.mxu0 %v139
    %173 = vmatpush.msra.mxu0 %v138
    %174 = vmatpush.msra.mxu0 %v137
    %175 = vmatpush.msra.mxu0 %v136
    %176 = vmatpush.msra.mxu0 %v135
    %177 = vmatpush.msra.mxu0 %v134
    %178 = vmatpush.msra.mxu0 %v133
    %179 = vmatpush.msra.mxu0 %v132
    %180 = vmatpush.msra.mxu0 %v131
    %181 = vmatpush.msra.mxu0 %v130
    %182 = vmatpush.msra.mxu0 %v129
    %183 = vmatmul.f32.gmra.mxu0 %v165
    %v184 = vpop.f32.mrf.mxu0
    %v185 = vadd.f32 0.0, %v184
    %186 = vdwg.mxu0
    %v187 = vadd.f32 %v166, %v185
    %v188 = vld [vmem:[#allocation2 + $0x3] sm:$0x1]
    %189 = vmatpush.msra.mxu0 %v144
    %190 = vmatpush.msra.mxu0 %v143
    %191 = vmatpush.msra.mxu0 %v142
    %192 = vmatpush.msra.mxu0 %v141
    %193 = vmatpush.msra.mxu0 %v140
    %194 = vmatpush.msra.mxu0 %v139
    %195 = vmatpush.msra.mxu0 %v138
    %196 = vmatpush.msra.mxu0 %v137
    %197 = vmatpush.msra.mxu0 %v136
    %198 = vmatpush.msra.mxu0 %v135
    %199 = vmatpush.msra.mxu0 %v134
    %200 = vmatpush.msra.mxu0 %v133
    %201 = vmatpush.msra.mxu0 %v132
    %202 = vmatpush.msra.mxu0 %v131
    %203 = vmatpush.msra.mxu0 %v130
    %204 = vmatpush.msra.mxu0 %v129
    %205 = vmatmul.f32.gmra.mxu0 %v187
    %v206 = vpop.f32.mrf.mxu0
    %v207 = vadd.f32 0.0, %v206
    %208 = vdwg.mxu0
    %v209 = vadd.f32 %v188, %v207
    %v210 = vld [vmem:[#allocation2 + $0x4] sm:$0x1]
    %211 = vmatpush.msra.mxu0 %v144
    %212 = vmatpush.msra.mxu0 %v143
    %213 = vmatpush.msra.mxu0 %v142
    %214 = vmatpush.msra.mxu0 %v141
    %215 = vmatpush.msra.mxu0 %v140
    %216 = vmatpush.msra.mxu0 %v139
    %217 = vmatpush.msra.mxu0 %v138
    %218 = vmatpush.msra.mxu0 %v137
    %219 = vmatpush.msra.mxu0 %v136
    %220 = vmatpush.msra.mxu0 %v135
    %221 = vmatpush.msra.mxu0 %v134
    %222 = vmatpush.msra.mxu0 %v133
    %223 = vmatpush.msra.mxu0 %v132
    %224 = vmatpush.msra.mxu0 %v131
    %225 = vmatpush.msra.mxu0 %v130
    %226 = vmatpush.msra.mxu0 %v129
    %227 = vmatmul.f32.gmra.mxu0 %v209
    %v228 = vpop.f32.mrf.mxu0
    %v229 = vadd.f32 0.0, %v228
    %230 = vdwg.mxu0
    %v231 = vadd.f32 %v210, %v229
    %v232 = vld [vmem:[#allocation2 + $0x5] sm:$0x1]
    %233 = vmatpush.msra.mxu0 %v144
    %234 = vmatpush.msra.mxu0 %v143
    %235 = vmatpush.msra.mxu0 %v142
    %236 = vmatpush.msra.mxu0 %v141
    %237 = vmatpush.msra.mxu0 %v140
    %238 = vmatpush.msra.mxu0 %v139
    %239 = vmatpush.msra.mxu0 %v138
    %240 = vmatpush.msra.mxu0 %v137
    %241 = vmatpush.msra.mxu0 %v136
    %242 = vmatpush.msra.mxu0 %v135
    %243 = vmatpush.msra.mxu0 %v134
    %244 = vmatpush.msra.mxu0 %v133
    %245 = vmatpush.msra.mxu0 %v132
    %246 = vmatpush.msra.mxu0 %v131
    %247 = vmatpush.msra.mxu0 %v130
    %248 = vmatpush.msra.mxu0 %v129
    %249 = vmatmul.f32.gmra.mxu0 %v231
    %v250 = vpop.f32.mrf.mxu0
    %v251 = vadd.f32 0.0, %v250
    %252 = vdwg.mxu0
    %v253 = vadd.f32 %v232, %v251
    %v254 = vld [vmem:[#allocation2 + $0x6] sm:$0x1]
    %255 = vmatpush.msra.mxu0 %v144
    %256 = vmatpush.msra.mxu0 %v143
    %257 = vmatpush.msra.mxu0 %v142
    %258 = vmatpush.msra.mxu0 %v141
    %259 = vmatpush.msra.mxu0 %v140
    %260 = vmatpush.msra.mxu0 %v139
    %261 = vmatpush.msra.mxu0 %v138
    %262 = vmatpush.msra.mxu0 %v137
    %263 = vmatpush.msra.mxu0 %v136
    %264 = vmatpush.msra.mxu0 %v135
    %265 = vmatpush.msra.mxu0 %v134
    %266 = vmatpush.msra.mxu0 %v133
    %267 = vmatpush.msra.mxu0 %v132
    %268 = vmatpush.msra.mxu0 %v131
    %269 = vmatpush.msra.mxu0 %v130
    %270 = vmatpush.msra.mxu0 %v129
    %271 = vmatmul.f32.gmra.mxu0 %v253
    %v272 = vpop.f32.mrf.mxu0
    %v273 = vadd.f32 0.0, %v272
    %274 = vdwg.mxu0
    %v275 = vadd.f32 %v254, %v273
    %v276 = vld [vmem:[#allocation2 + $0x7] sm:$0x1]
    %277 = vmatpush.msra.mxu0 %v144
    %278 = vmatpush.msra.mxu0 %v143
    %279 = vmatpush.msra.mxu0 %v142
    %280 = vmatpush.msra.mxu0 %v141
    %281 = vmatpush.msra.mxu0 %v140
    %282 = vmatpush.msra.mxu0 %v139
    %283 = vmatpush.msra.mxu0 %v138
    %284 = vmatpush.msra.mxu0 %v137
    %285 = vmatpush.msra.mxu0 %v136
    %286 = vmatpush.msra.mxu0 %v135
    %287 = vmatpush.msra.mxu0 %v134
    %288 = vmatpush.msra.mxu0 %v133
    %289 = vmatpush.msra.mxu0 %v132
    %290 = vmatpush.msra.mxu0 %v131
    %291 = vmatpush.msra.mxu0 %v130
    %292 = vmatpush.msra.mxu0 %v129
    %293 = vmatmul.f32.gmra.mxu0 %v275
    %v294 = vpop.f32.mrf.mxu0
    %v295 = vadd.f32 0.0, %v294
    %296 = vdwg.mxu0
    %v297 = vadd.f32 %v276, %v295
    %298 = vst [vmem:[%s5] sm:$0x1] %v297
    // Predicated region
    $region34: #{scan.1} parent=1 // pred_check
      _
    $region35: #{scan.1} parent=1 // pred_check_branch
      %300 = sbr.rel (0) target = $region37
    $region36: #{scan.1} parent=1 // pred_region
      _
    $region37: #{scan.1} parent=1 // pred_fallthru
      _
    // Predicated region
    $region38: #{scan.1} parent=1 // pred_check
      _
    $region39: #{scan.1} parent=1 // pred_check_branch
      %302 = sbr.rel (0) target = $region41
    $region40: #{scan.1} parent=1 // pred_region
      _
    $region41: #{scan.1} parent=1 // pred_fallthru
      _
    %303 = vsyncpa [#allocation4], 1
    %304 = vsyncpa [#allocation6], 1

</llo_original>
